<compile_context>
chip_gen: v7x
topology: tpu7x:2x2x1
jax: 0.10.0
libtpu: 0.0.40
codegen_flags: <defaults>
</compile_context>

<pallas_src>
import jax
import jax.numpy as jnp
import numpy as np
from jax.experimental import pallas as pl
from jax.experimental.pallas import tpu as pltpu

BN_EPS = 1e-5


def attn_readout_kernel(feat_ref, last_ref, mask_ref, bn_ref,
                        wu_ref, we_ref, wlast_ref, blast_ref,
                        wout_ref, wls_rst_ref,
                        score_ref, rst_ref, item_ref):
    TB, L, D = feat_ref.shape
    H = wls_rst_ref.shape[1]
    mm_dtype = wu_ref.dtype          # bf16 or f32 MXU inputs; accumulation is f32

    mask = mask_ref[...]                                   # (TB, L, 1) f32 {0,1}
    feat = feat_ref[...].astype(jnp.float32)               # (TB, L, D)

    # BatchNorm1d(session_len), eval mode: per-session-position running stats,
    # broadcast over batch and feature axes.
    bn = bn_ref[...]                                       # (L, 4) = [gamma|beta|mean|var]
    gamma, beta, mean, var = bn[:, 0:1], bn[:, 1:2], bn[:, 2:3], bn[:, 3:4]
    inv_std = jax.lax.rsqrt(var + BN_EPS)                  # (L, 1)
    feat = (feat - mean) * (gamma * inv_std) + beta

    # feat_drop has p=0.0 -> identity; a single mask multiply suffices (the
    # module's second multiply hits rows that are already zero).
    feat = feat * mask

    # fc_u: masked rows of feat are already zero, so feat_u rows are zero too.
    feat2d = feat.reshape(TB * L, D)
    feat_u = jnp.dot(feat2d.astype(mm_dtype), wu_ref[...],
                     preferred_element_type=jnp.float32)   # (TB*L, H)

    # Fused fc_v + short-term half of mlp_n_ls: one (TB, D) @ (D, 2H) matmul.
    last = last_ref[...].reshape(TB, D)
    fused = jnp.dot(last.astype(mm_dtype), wlast_ref[...],
                    preferred_element_type=jnp.float32) + blast_ref[...]   # (TB, 2H)
    feat_v = fused[:, :H]                                  # fc_v(last_nodes)
    item_short = fused[:, H:]                              # last @ W_ls_short + b_ls

    # e = sigmoid(fc_e(tanh(feat_u + feat_v)) * mask)
    t = jnp.tanh(feat_u.reshape(TB, L, H) + feat_v.reshape(TB, 1, H))
    e = jnp.dot(t.reshape(TB * L, H).astype(mm_dtype), we_ref[...],
                preferred_element_type=jnp.float32).reshape(TB, L, 2)
    e = jax.nn.sigmoid(e * mask)                           # masked rows -> sigmoid(0)=0.5

    # get_long_term: masked softmax over the session axis (select instead of the
    # module's additive -2e32 mask; identical result at f32).
    e0 = jnp.where(mask > 0, e[:, :, 1:2], jnp.float32(-1e30))   # (TB, L, 1)
    e0_max = jnp.max(e0, axis=1, keepdims=True)
    p = jnp.exp(e0 - e0_max)
    beta_w = p / jnp.sum(p, axis=1, keepdims=True)

    rst = jnp.sum(feat * beta_w, axis=1)                   # (TB, D); feat already masked
    rst = jnp.dot(rst.astype(mm_dtype), wout_ref[...],
                  preferred_element_type=jnp.float32)      # fc_out -> (TB, O)

    # cat((rst, short)) @ W_ls  ==  rst @ W_ls[:O] + short @ W_ls[O:]  (+ b_ls, folded above)
    item = jnp.dot(rst.astype(mm_dtype), wls_rst_ref[...],
                   preferred_element_type=jnp.float32) + item_short       # (TB, H)

    score_ref[...] = e
    rst_ref[...] = rst
    item_ref[...] = item


def _round_up(x, m):
    return ((x + m - 1) // m) * m


def _choose_block_b(batch, session_len, input_dim, itemsize):
    # Target TB * L >= 256 MXU rows (fills the v6e/v7x MXU tile; >=128 is enough
    # on v5e), capped so the double-buffered feat block stays far below the
    # VMEM scoped default on every generation (incl. v7x's 64 MiB physical).
    tb = max(1, -(-256 // session_len))
    vmem_cap = max(1, (4 * 1024 * 1024) // max(1, session_len * input_dim * itemsize))
    return min(tb, vmem_cap)


def attn_readout(feat, last_nodes, mask, params, *, block_b=None, use_bf16=False):
    B, L, D = feat.shape
    H = params["wu"].shape[1]
    O = params["wout"].shape[1]
    # NOTE: when output_dim == input_dim the PyTorch module skips fc_out;
    # pass an identity matrix as params["wout"] in that configuration.

    cdtype = jnp.bfloat16 if use_bf16 else jnp.float32
    itemsize = jnp.dtype(cdtype).itemsize

    # ---- operand packing / fusion (wrapper side) ----
    bn_pack = jnp.concatenate(
        [params["bn_gamma"], params["bn_beta"], params["bn_mean"], params["bn_var"]],
        axis=1).astype(jnp.float32)                                               # (L, 4)
    w_last = jnp.concatenate([params["wv"], params["wls_short"]], axis=1).astype(cdtype)  # (D, 2H)
    b_last = jnp.concatenate([params["bv"], params["bls"]], axis=1).astype(jnp.float32)   # (1, 2H)
    wu = params["wu"].astype(cdtype)
    we = params["we"].astype(cdtype)
    wout = params["wout"].astype(cdtype)
    wls_rst = params["wls_rst"].astype(cdtype)

    feat = feat.astype(cdtype)
    last_nodes = last_nodes.astype(cdtype)
    mask = mask.astype(jnp.float32)

    # ---- batch tiling ----
    TB = _choose_block_b(B, L, D, itemsize) if block_b is None else int(block_b)
    if TB >= B:
        TB = B                      # one block covering the whole (unpadded) batch
    elif TB % 8 != 0:
        TB = _round_up(TB, 8)       # keep 2-D output blocks sublane-aligned when tiling
    Bp = _round_up(B, TB)
    if Bp != B:
        pad = ((0, Bp - B), (0, 0), (0, 0))
        feat = jnp.pad(feat, pad)
        last_nodes = jnp.pad(last_nodes, pad)
        mask = jnp.pad(mask, pad)   # zero mask -> padded sessions produce zeros

    batched = lambda shape: pl.BlockSpec(shape, lambda b: (b,) + (0,) * (len(shape) - 1))
    shared = lambda shape: pl.BlockSpec(shape, lambda b: (0,) * len(shape))

    out_shape = (
        jax.ShapeDtypeStruct((Bp, L, 2), jnp.float32),   # score
        jax.ShapeDtypeStruct((Bp, O), jnp.float32),      # rst (long-term repr)
        jax.ShapeDtypeStruct((Bp, H), jnp.float32),      # item-level seq repr
    )

    score, rst, item = pl.pallas_call(
        attn_readout_kernel,
        out_shape=out_shape,
        grid=(pl.cdiv(Bp, TB),),
        in_specs=[
            batched((TB, L, D)),     # feat
            batched((TB, 1, D)),     # last_nodes
            batched((TB, L, 1)),     # mask
            shared((L, 4)),          # packed BN [gamma|beta|mean|var]
            shared((D, H)),          # W_u
            shared((H, 2)),          # W_e
            shared((D, 2 * H)),      # [W_v | W_ls_short]
            shared((1, 2 * H)),      # [b_v | b_ls]
            shared((D, O)),          # W_out
            shared((O, H)),          # W_ls (rst half)
        ],
        out_specs=(
            batched((TB, L, 2)),
            batched((TB, O)),
            batched((TB, H)),
        ),
        compiler_params=pltpu.CompilerParams(dimension_semantics=("parallel",)),
    )(feat, last_nodes, mask, bn_pack, wu, we, w_last, b_last, wout, wls_rst)

    return score[:B], rst[:B], item[:B]


def attn_readout_reference(feat, last_nodes, mask, p):
    """Pure-JAX mirror of the PyTorch forward (eval mode, feat_drop=0)."""
    inv_std = 1.0 / jnp.sqrt(p["bn_var"][None] + BN_EPS)
    f = (feat - p["bn_mean"][None]) * inv_std * p["bn_gamma"][None] + p["bn_beta"][None]
    f = f * mask
    f = f * mask
    fu = jnp.einsum("bld,dh->blh", f, p["wu"]) * mask
    fv = jnp.einsum("bqd,dh->bqh", last_nodes, p["wv"]) + p["bv"][None]
    e = jnp.einsum("blh,ht->blt", jnp.tanh(fu + fv), p["we"]) * mask
    e = jax.nn.sigmoid(e)
    mask1 = (mask - 1.0) * 2e32
    e0 = e[:, :, 1] + mask1[:, :, 0]
    beta = jax.nn.softmax(e0, axis=1)
    fn = f * beta[:, :, None] * mask
    rst = jnp.sum(fn, axis=1) @ p["wout"]
    short = last_nodes[:, 0, :]
    item = rst @ p["wls_rst"] + short @ p["wls_short"] + p["bls"]
    return e, rst, item


def make_params(key, input_dim, hidden_dim, output_dim, session_len):
    ks = jax.random.split(key, 10)
    n = lambda k, s, scale=0.1: (scale * jax.random.normal(k, s)).astype(jnp.float32)
    params = {
        # BatchNorm1d(session_len) eval-mode parameters, stored as (L, 1).
        "bn_gamma": 1.0 + n(ks[0], (session_len, 1)),
        "bn_beta": n(ks[1], (session_len, 1)),
        "bn_mean": n(ks[2], (session_len, 1)),
        "bn_var": 1.0 + 0.1 * jax.random.uniform(ks[3], (session_len, 1)).astype(jnp.float32),
        # Linear weights, pre-transposed to (in, out).
        "wu": n(ks[4], (input_dim, hidden_dim)),
        "wv": n(ks[5], (input_dim, hidden_dim)),
        "bv": n(ks[6], (1, hidden_dim)),
        "we": n(ks[7], (hidden_dim, 2)),
        "wout": n(ks[8], (input_dim, output_dim)),
        "bls": n(ks[9], (1, hidden_dim)),
    }
    k1, k2 = jax.random.split(jax.random.fold_in(key, 123), 2)
    # mlp_n_ls weight split along its input axis according to
    # cat((rst[output_dim], short_term[input_dim]), -1).
    params["wls_rst"] = n(k1, (output_dim, hidden_dim))
    params["wls_short"] = n(k2, (input_dim, hidden_dim))
    return params


if __name__ == "__main__":
    B, L, D, H, O = 2, 8, 32, 16, 16   # batch, session_len, input_dim, hidden_dim, output_dim
    key = jax.random.PRNGKey(0)
    k_feat, k_last, k_par = jax.random.split(key, 3)

    feat = jax.random.normal(k_feat, (B, L, D), dtype=jnp.float32)
    last_nodes = jax.random.normal(k_last, (B, 1, D), dtype=jnp.float32)
    lengths = jnp.array([5, 8], dtype=jnp.int32)
    mask = (jnp.arange(L)[None, :] < lengths[:, None]).astype(jnp.float32)[:, :, None]  # (B, L, 1)

    params = make_params(k_par, D, H, O, L)

    # 1) f32 path, small batch (single grid step)
    score, rst, item = attn_readout(feat, last_nodes, mask, params)
    jax.block_until_ready((score, rst, item))
    score_r, rst_r, item_r = attn_readout_reference(feat, last_nodes, mask, params)
    np.testing.assert_allclose(np.asarray(score), np.asarray(score_r), rtol=1e-4, atol=1e-4)
    np.testing.assert_allclose(np.asarray(rst), np.asarray(rst_r), rtol=1e-4, atol=1e-4)
    np.testing.assert_allclose(np.asarray(item), np.asarray(item_r), rtol=1e-4, atol=1e-4)

    # 2) batch-tiled path (grid > 1, padded batch), f32
    B2 = 20
    kf2, kl2, km2 = jax.random.split(jax.random.PRNGKey(1), 3)
    feat2 = jax.random.normal(kf2, (B2, L, D), dtype=jnp.float32)
    last2 = jax.random.normal(kl2, (B2, 1, D), dtype=jnp.float32)
    len2 = jax.random.randint(km2, (B2,), 1, L + 1)
    mask2 = (jnp.arange(L)[None, :] < len2[:, None]).astype(jnp.float32)[:, :, None]
    s2, r2, i2 = attn_readout(feat2, last2, mask2, params, block_b=8)
    jax.block_until_ready((s2, r2, i2))
    s2r, r2r, i2r = attn_readout_reference(feat2, last2, mask2, params)
    np.testing.assert_allclose(np.asarray(s2), np.asarray(s2r), rtol=1e-4, atol=1e-4)
    np.testing.assert_allclose(np.asarray(r2), np.asarray(r2r), rtol=1e-4, atol=1e-4)
    np.testing.assert_allclose(np.asarray(i2), np.asarray(i2r), rtol=1e-4, atol=1e-4)

    # 3) bf16 MXU-input path (f32 accumulation + f32 elementwise), loose tolerance
    sb, rb, ib = attn_readout(feat2, last2, mask2, params, block_b=8, use_bf16=True)
    jax.block_until_ready((sb, rb, ib))
    np.testing.assert_allclose(np.asarray(sb), np.asarray(s2r), rtol=5e-2, atol=5e-2)
    np.testing.assert_allclose(np.asarray(rb), np.asarray(r2r), rtol=5e-2, atol=5e-2)
    np.testing.assert_allclose(np.asarray(ib), np.asarray(i2r), rtol=5e-2, atol=5e-2)

    print("KERNEL_OK")
</pallas_src>

<mosaic_0001>
module attributes {stable_mosaic.version = 11 : i64} {
  func.func @attn_readout_kernel(%arg0: i32, %arg1: memref<2x8x32xf32, #tpu.memory_space<vmem>>, %arg2: memref<2x1x32xf32, #tpu.memory_space<vmem>>, %arg3: memref<2x8x1xf32, #tpu.memory_space<vmem>>, %arg4: memref<8x4xf32, #tpu.memory_space<vmem>>, %arg5: memref<32x16xf32, #tpu.memory_space<vmem>>, %arg6: memref<16x2xf32, #tpu.memory_space<vmem>>, %arg7: memref<32x32xf32, #tpu.memory_space<vmem>>, %arg8: memref<1x32xf32, #tpu.memory_space<vmem>>, %arg9: memref<32x16xf32, #tpu.memory_space<vmem>>, %arg10: memref<16x16xf32, #tpu.memory_space<vmem>>, %arg11: memref<2x8x2xf32, #tpu.memory_space<vmem>>, %arg12: memref<2x16xf32, #tpu.memory_space<vmem>>, %arg13: memref<2x16xf32, #tpu.memory_space<vmem>>) attributes {dimension_semantics = [#tpu.dimension_semantics<parallel>], iteration_bounds = array<i64: 1>, scalar_prefetch = 0 : i64, scratch_operands = 0 : i64, tpu.core_type = #tpu.core_type<tc>, window_params = [{transform_indices = @transform_0, window_bounds = array<i64: 2, 8, 32>}, {transform_indices = @transform_1, window_bounds = array<i64: 2, 1, 32>}, {transform_indices = @transform_2, window_bounds = array<i64: 2, 8, 1>}, {pipeline_mode = #tpu.pipeline_mode<synchronous>, transform_indices = @transform_3, window_bounds = array<i64: 8, 4>}, {pipeline_mode = #tpu.pipeline_mode<synchronous>, transform_indices = @transform_4, window_bounds = array<i64: 32, 16>}, {pipeline_mode = #tpu.pipeline_mode<synchronous>, transform_indices = @transform_5, window_bounds = array<i64: 16, 2>}, {pipeline_mode = #tpu.pipeline_mode<synchronous>, transform_indices = @transform_6, window_bounds = array<i64: 32, 32>}, {pipeline_mode = #tpu.pipeline_mode<synchronous>, transform_indices = @transform_7, window_bounds = array<i64: 1, 32>}, {pipeline_mode = #tpu.pipeline_mode<synchronous>, transform_indices = @transform_8, window_bounds = array<i64: 32, 16>}, {pipeline_mode = #tpu.pipeline_mode<synchronous>, transform_indices = @transform_9, window_bounds = array<i64: 16, 16>}, {transform_indices = @transform_10, window_bounds = array<i64: 2, 8, 2>}, {transform_indices = @transform_11, window_bounds = array<i64: 2, 16>}, {transform_indices = @transform_12, window_bounds = array<i64: 2, 16>}]} {
    %c0 = arith.constant 0 : index
    %c0_0 = arith.constant 0 : index
    %c0_1 = arith.constant 0 : index
    %0 = vector.load %arg3[%c0, %c0_0, %c0_1] : memref<2x8x1xf32, #tpu.memory_space<vmem>>, vector<2x8x1xf32>
    %c0_2 = arith.constant 0 : index
    %c0_3 = arith.constant 0 : index
    %c0_4 = arith.constant 0 : index
    %1 = vector.load %arg1[%c0_2, %c0_3, %c0_4] : memref<2x8x32xf32, #tpu.memory_space<vmem>>, vector<2x8x32xf32>
    %c0_5 = arith.constant 0 : index
    %c0_6 = arith.constant 0 : index
    %2 = vector.load %arg4[%c0_5, %c0_6] : memref<8x4xf32, #tpu.memory_space<vmem>>, vector<8x4xf32>
    %3 = vector.extract_strided_slice %2 {offsets = [0, 0], sizes = [8, 1], strides = [1, 1]} : vector<8x4xf32> to vector<8x1xf32>
    %4 = vector.extract_strided_slice %2 {offsets = [0, 1], sizes = [8, 1], strides = [1, 1]} : vector<8x4xf32> to vector<8x1xf32>
    %5 = vector.extract_strided_slice %2 {offsets = [0, 2], sizes = [8, 1], strides = [1, 1]} : vector<8x4xf32> to vector<8x1xf32>
    %6 = vector.extract_strided_slice %2 {offsets = [0, 3], sizes = [8, 1], strides = [1, 1]} : vector<8x4xf32> to vector<8x1xf32>
    %cst = arith.constant 9.99999974E-6 : f32
    %7 = vector.broadcast %cst : f32 to vector<8x1xf32>
    %8 = arith.addf %6, %7 : vector<8x1xf32>
    %9 = math.rsqrt %8 : vector<8x1xf32>
    %10 = vector.shape_cast %5 : vector<8x1xf32> to vector<1x8x1xf32>
    %11 = vector.broadcast %10 : vector<1x8x1xf32> to vector<2x8x32xf32>
    %12 = arith.subf %1, %11 : vector<2x8x32xf32>
    %13 = arith.mulf %3, %9 : vector<8x1xf32>
    %14 = vector.shape_cast %13 : vector<8x1xf32> to vector<1x8x1xf32>
    %15 = vector.broadcast %14 : vector<1x8x1xf32> to vector<2x8x32xf32>
    %16 = arith.mulf %12, %15 : vector<2x8x32xf32>
    %17 = vector.shape_cast %4 : vector<8x1xf32> to vector<1x8x1xf32>
    %18 = vector.broadcast %17 : vector<1x8x1xf32> to vector<2x8x32xf32>
    %19 = arith.addf %16, %18 : vector<2x8x32xf32>
    %20 = vector.broadcast %0 : vector<2x8x1xf32> to vector<2x8x32xf32>
    %21 = arith.mulf %19, %20 : vector<2x8x32xf32>
    %22 = vector.shape_cast %21 : vector<2x8x32xf32> to vector<16x32xf32>
    %c0_7 = arith.constant 0 : index
    %c0_8 = arith.constant 0 : index
    %23 = vector.load %arg5[%c0_7, %c0_8] : memref<32x16xf32, #tpu.memory_space<vmem>>, vector<32x16xf32>
    %cst_9 = arith.constant dense<0.000000e+00> : vector<16x16xf32>
    %24 = tpu.matmul %22, %23, %cst_9 {dimension_numbers = #tpu.dot_dimension_numbers<[1], [0], [0], [1], [0, 0, 1, 1], [], []>} : vector<16x32xf32>, vector<32x16xf32>, vector<16x16xf32> -> vector<16x16xf32>
    %c0_10 = arith.constant 0 : index
    %c0_11 = arith.constant 0 : index
    %c0_12 = arith.constant 0 : index
    %25 = vector.load %arg2[%c0_10, %c0_11, %c0_12] : memref<2x1x32xf32, #tpu.memory_space<vmem>>, vector<2x1x32xf32>
    %26 = vector.shape_cast %25 : vector<2x1x32xf32> to vector<2x32xf32>
    %c0_13 = arith.constant 0 : index
    %c0_14 = arith.constant 0 : index
    %27 = vector.load %arg7[%c0_13, %c0_14] : memref<32x32xf32, #tpu.memory_space<vmem>>, vector<32x32xf32>
    %cst_15 = arith.constant dense<0.000000e+00> : vector<2x32xf32>
    %28 = tpu.matmul %26, %27, %cst_15 {dimension_numbers = #tpu.dot_dimension_numbers<[1], [0], [0], [1], [0, 0, 1, 1], [], []>} : vector<2x32xf32>, vector<32x32xf32>, vector<2x32xf32> -> vector<2x32xf32>
    %c0_16 = arith.constant 0 : index
    %c0_17 = arith.constant 0 : index
    %29 = vector.load %arg8[%c0_16, %c0_17] : memref<1x32xf32, #tpu.memory_space<vmem>>, vector<1x32xf32>
    %30 = vector.broadcast %29 : vector<1x32xf32> to vector<2x32xf32>
    %31 = arith.addf %28, %30 : vector<2x32xf32>
    %32 = vector.extract_strided_slice %31 {offsets = [0, 0], sizes = [2, 16], strides = [1, 1]} : vector<2x32xf32> to vector<2x16xf32>
    %33 = vector.extract_strided_slice %31 {offsets = [0, 16], sizes = [2, 16], strides = [1, 1]} : vector<2x32xf32> to vector<2x16xf32>
    %34 = vector.shape_cast %24 : vector<16x16xf32> to vector<2x8x16xf32>
    %35 = vector.shape_cast %32 : vector<2x16xf32> to vector<2x1x16xf32>
    %36 = vector.broadcast %35 : vector<2x1x16xf32> to vector<2x8x16xf32>
    %37 = arith.addf %34, %36 : vector<2x8x16xf32>
    %38 = math.tanh %37 : vector<2x8x16xf32>
    %39 = vector.shape_cast %38 : vector<2x8x16xf32> to vector<16x16xf32>
    %c0_18 = arith.constant 0 : index
    %c0_19 = arith.constant 0 : index
    %40 = vector.load %arg6[%c0_18, %c0_19] : memref<16x2xf32, #tpu.memory_space<vmem>>, vector<16x2xf32>
    %cst_20 = arith.constant dense<0.000000e+00> : vector<16x2xf32>
    %41 = tpu.matmul %39, %40, %cst_20 {dimension_numbers = #tpu.dot_dimension_numbers<[1], [0], [0], [1], [0, 0, 1, 1], [], []>} : vector<16x16xf32>, vector<16x2xf32>, vector<16x2xf32> -> vector<16x2xf32>
    %42 = vector.shape_cast %41 : vector<16x2xf32> to vector<2x8x2xf32>
    %43 = vector.broadcast %0 : vector<2x8x1xf32> to vector<2x8x2xf32>
    %44 = arith.mulf %42, %43 : vector<2x8x2xf32>
    %45 = arith.negf %44 : vector<2x8x2xf32>
    %46 = math.exp %45 : vector<2x8x2xf32>
    %cst_21 = arith.constant 1.000000e+00 : f32
    %47 = vector.broadcast %cst_21 : f32 to vector<2x8x2xf32>
    %48 = arith.addf %47, %46 : vector<2x8x2xf32>
    %49 = arith.divf %47, %48 : vector<2x8x2xf32>
    %cst_22 = arith.constant 0.000000e+00 : f32
    %50 = vector.broadcast %cst_22 : f32 to vector<2x8x1xf32>
    %51 = arith.cmpf ogt, %0, %50 : vector<2x8x1xf32>
    %52 = vector.extract_strided_slice %49 {offsets = [0, 0, 1], sizes = [2, 8, 1], strides = [1, 1, 1]} : vector<2x8x2xf32> to vector<2x8x1xf32>
    %cst_23 = arith.constant -1.000000e+30 : f32
    %53 = vector.broadcast %cst_23 : f32 to vector<2x8x1xf32>
    %54 = arith.select %51, %52, %53 : vector<2x8x1xi1>, vector<2x8x1xf32>
    %cst_24 = arith.constant dense<0xFF800000> : vector<2x1xf32>
    %55 = vector.multi_reduction <maximumf>, %54, %cst_24 [1] : vector<2x8x1xf32> to vector<2x1xf32>
    %56 = vector.shape_cast %55 : vector<2x1xf32> to vector<2x1x1xf32>
    %57 = vector.broadcast %56 : vector<2x1x1xf32> to vector<2x8x1xf32>
    %58 = arith.subf %54, %57 : vector<2x8x1xf32>
    %59 = math.exp %58 : vector<2x8x1xf32>
    %cst_25 = arith.constant dense<0.000000e+00> : vector<2x1xf32>
    %60 = vector.multi_reduction <add>, %59, %cst_25 [1] : vector<2x8x1xf32> to vector<2x1xf32>
    %61 = vector.shape_cast %60 : vector<2x1xf32> to vector<2x1x1xf32>
    %62 = vector.broadcast %61 : vector<2x1x1xf32> to vector<2x8x1xf32>
    %63 = arith.divf %59, %62 : vector<2x8x1xf32>
    %64 = vector.broadcast %63 : vector<2x8x1xf32> to vector<2x8x32xf32>
    %65 = arith.mulf %21, %64 : vector<2x8x32xf32>
    %cst_26 = arith.constant dense<0.000000e+00> : vector<2x32xf32>
    %66 = vector.multi_reduction <add>, %65, %cst_26 [1] : vector<2x8x32xf32> to vector<2x32xf32>
    %c0_27 = arith.constant 0 : index
    %c0_28 = arith.constant 0 : index
    %67 = vector.load %arg9[%c0_27, %c0_28] : memref<32x16xf32, #tpu.memory_space<vmem>>, vector<32x16xf32>
    %cst_29 = arith.constant dense<0.000000e+00> : vector<2x16xf32>
    %68 = tpu.matmul %66, %67, %cst_29 {dimension_numbers = #tpu.dot_dimension_numbers<[1], [0], [0], [1], [0, 0, 1, 1], [], []>} : vector<2x32xf32>, vector<32x16xf32>, vector<2x16xf32> -> vector<2x16xf32>
    %c0_30 = arith.constant 0 : index
    %c0_31 = arith.constant 0 : index
    %69 = vector.load %arg10[%c0_30, %c0_31] : memref<16x16xf32, #tpu.memory_space<vmem>>, vector<16x16xf32>
    %cst_32 = arith.constant dense<0.000000e+00> : vector<2x16xf32>
    %70 = tpu.matmul %68, %69, %cst_32 {dimension_numbers = #tpu.dot_dimension_numbers<[1], [0], [0], [1], [0, 0, 1, 1], [], []>} : vector<2x16xf32>, vector<16x16xf32>, vector<2x16xf32> -> vector<2x16xf32>
    %71 = arith.addf %70, %33 : vector<2x16xf32>
    %c0_33 = arith.constant 0 : index
    %c0_34 = arith.constant 0 : index
    %c0_35 = arith.constant 0 : index
    %72 = vector.load %arg11[%c0_33, %c0_34, %c0_35] : memref<2x8x2xf32, #tpu.memory_space<vmem>>, vector<2x8x2xf32>
    tpu.vector_store %arg11[%c0_33, %c0_34, %c0_35], %49 {strides = array<i32>} : memref<2x8x2xf32, #tpu.memory_space<vmem>>, vector<2x8x2xf32>,
    %c0_36 = arith.constant 0 : index
    %c0_37 = arith.constant 0 : index
    %73 = vector.load %arg12[%c0_36, %c0_37] : memref<2x16xf32, #tpu.memory_space<vmem>>, vector<2x16xf32>
    tpu.vector_store %arg12[%c0_36, %c0_37], %68 {strides = array<i32>} : memref<2x16xf32, #tpu.memory_space<vmem>>, vector<2x16xf32>,
    %c0_38 = arith.constant 0 : index
    %c0_39 = arith.constant 0 : index
    %74 = vector.load %arg13[%c0_38, %c0_39] : memref<2x16xf32, #tpu.memory_space<vmem>>, vector<2x16xf32>
    tpu.vector_store %arg13[%c0_38, %c0_39], %71 {strides = array<i32>} : memref<2x16xf32, #tpu.memory_space<vmem>>, vector<2x16xf32>,
    return
  }
  func.func @transform_0(%arg0: i32) -> (i32, i32, i32) {
    %c0_i32 = arith.constant 0 : i32
    %c0_i32_0 = arith.constant 0 : i32
    %c0_i32_1 = arith.constant 0 : i32
    return %arg0, %c0_i32, %c0_i32_0 : i32, i32, i32
  }
  func.func @transform_1(%arg0: i32) -> (i32, i32, i32) {
    %c0_i32 = arith.constant 0 : i32
    %c0_i32_0 = arith.constant 0 : i32
    %c0_i32_1 = arith.constant 0 : i32
    return %arg0, %c0_i32, %c0_i32_0 : i32, i32, i32
  }
  func.func @transform_2(%arg0: i32) -> (i32, i32, i32) {
    %c0_i32 = arith.constant 0 : i32
    %c0_i32_0 = arith.constant 0 : i32
    %c0_i32_1 = arith.constant 0 : i32
    return %arg0, %c0_i32, %c0_i32_0 : i32, i32, i32
  }
  func.func @transform_3(%arg0: i32) -> (i32, i32) {
    %c0_i32 = arith.constant 0 : i32
    %c0_i32_0 = arith.constant 0 : i32
    %c0_i32_1 = arith.constant 0 : i32
    return %c0_i32, %c0_i32_0 : i32, i32
  }
  func.func @transform_4(%arg0: i32) -> (i32, i32) {
    %c0_i32 = arith.constant 0 : i32
    %c0_i32_0 = arith.constant 0 : i32
    %c0_i32_1 = arith.constant 0 : i32
    return %c0_i32, %c0_i32_0 : i32, i32
  }
  func.func @transform_5(%arg0: i32) -> (i32, i32) {
    %c0_i32 = arith.constant 0 : i32
    %c0_i32_0 = arith.constant 0 : i32
    %c0_i32_1 = arith.constant 0 : i32
    return %c0_i32, %c0_i32_0 : i32, i32
  }
  func.func @transform_6(%arg0: i32) -> (i32, i32) {
    %c0_i32 = arith.constant 0 : i32
    %c0_i32_0 = arith.constant 0 : i32
    %c0_i32_1 = arith.constant 0 : i32
    return %c0_i32, %c0_i32_0 : i32, i32
  }
  func.func @transform_7(%arg0: i32) -> (i32, i32) {
    %c0_i32 = arith.constant 0 : i32
    %c0_i32_0 = arith.constant 0 : i32
    %c0_i32_1 = arith.constant 0 : i32
    return %c0_i32, %c0_i32_0 : i32, i32
  }
  func.func @transform_8(%arg0: i32) -> (i32, i32) {
    %c0_i32 = arith.constant 0 : i32
    %c0_i32_0 = arith.constant 0 : i32
    %c0_i32_1 = arith.constant 0 : i32
    return %c0_i32, %c0_i32_0 : i32, i32
  }
  func.func @transform_9(%arg0: i32) -> (i32, i32) {
    %c0_i32 = arith.constant 0 : i32
    %c0_i32_0 = arith.constant 0 : i32
    %c0_i32_1 = arith.constant 0 : i32
    return %c0_i32, %c0_i32_0 : i32, i32
  }
  func.func @transform_10(%arg0: i32) -> (i32, i32, i32) {
    %c0_i32 = arith.constant 0 : i32
    %c0_i32_0 = arith.constant 0 : i32
    %c0_i32_1 = arith.constant 0 : i32
    return %arg0, %c0_i32, %c0_i32_0 : i32, i32, i32
  }
  func.func @transform_11(%arg0: i32) -> (i32, i32) {
    %c0_i32 = arith.constant 0 : i32
    %c0_i32_0 = arith.constant 0 : i32
    return %arg0, %c0_i32 : i32, i32
  }
  func.func @transform_12(%arg0: i32) -> (i32, i32) {
    %c0_i32 = arith.constant 0 : i32
    %c0_i32_0 = arith.constant 0 : i32
    return %arg0, %c0_i32 : i32, i32
  }
}

</mosaic_0001>

<llo_original>
// kernel: tpu_custom_call.1
$region0: #{tpu_custom_call.1}
  #allocation0 [shape = 'u32[]', space=smem, size = 0x4, offset = 0x4, fixed_abs, tag = 'smem constant byte address 0x4 - core index']
  #allocation1 [shape = 'u32[144,128]{1,0:T(1,128)}', space=vmem, size = 0x12000, scoped, tag = 'internal scratch']
  %s0 = inlined_call_operand.vmem [shape: f32[2,8,32], index: 0, kind: input, shape index: {}]
  %s1 = inlined_call_operand.vmem [shape: f32[2,1,32], index: 1, kind: input, shape index: {}]
  %s2 = inlined_call_operand.vmem [shape: f32[2,8,1], index: 2, kind: input, shape index: {}]
  %s3 = inlined_call_operand.vmem [shape: f32[8,4], index: 3, kind: input, shape index: {}]
  %s4 = inlined_call_operand.vmem [shape: f32[32,16], index: 4, kind: input, shape index: {}]
  %s5 = inlined_call_operand.vmem [shape: f32[16,2], index: 5, kind: input, shape index: {}]
  %s6 = inlined_call_operand.vmem [shape: f32[32,32], index: 6, kind: input, shape index: {}]
  %s7 = inlined_call_operand.vmem [shape: f32[1,32], index: 7, kind: input, shape index: {}]
  %s8 = inlined_call_operand.vmem [shape: f32[32,16], index: 8, kind: input, shape index: {}]
  %s9 = inlined_call_operand.vmem [shape: f32[16,16], index: 9, kind: input, shape index: {}]
  %s10 = inlined_call_operand.vmem [shape: f32[2,8,2], index: 10, kind: output, shape index: {0}]
  %s11 = inlined_call_operand.hbm [shape: f32[2,16], index: 11, kind: output, shape index: {1}]
  %s12 = inlined_call_operand.hbm [shape: f32[2,16], index: 12, kind: output, shape index: {2}]
  %13 = xla_tuple %s10, %s11, %s12
  %s14 = sld [smem:[#allocation0]]
  $region66: #{tpu_custom_call.1} parent=0
    _
  %s16 = ssub.s32 1, %s14
  %s17 = scalar_select 0, %s16, %s14
  $region1: #{tpu_custom_call.1} parent=0
    #allocation2 [shape = 'u8[1024]{0}', space=vmem, size = 0x400, scoped, tag = 'output window, operand 1, single buffered']
    #allocation3 [shape = 's32[1]{0}', space=sflag, size = 0x4, scoped, tag = 'scoped memory for tpu_custom_call.1']
    #allocation4 [shape = 'u8[1024]{0}', space=vmem, size = 0x400, scoped, tag = 'output window, operand 2, single buffered']
    #allocation5 [shape = 's32[1]{0}', space=sflag, size = 0x4, scoped, tag = 'scoped memory for tpu_custom_call.1']
    %18 = vsyncpa [#allocation3], 0
    %19 = vsyncpa [#allocation5], 0
    // Predicated region
    $region2: #{tpu_custom_call.1} parent=1 // pred_check
      _
    $region3: #{tpu_custom_call.1} parent=1 // pred_check_branch
      %21 = sbr.rel (0) target = $region5
    $region4: #{tpu_custom_call.1} parent=1 // pred_region
      _
    $region5: #{tpu_custom_call.1} parent=1 // pred_fallthru
      _
    // Predicated region
    $region6: #{tpu_custom_call.1} parent=1 // pred_check
      _
    $region7: #{tpu_custom_call.1} parent=1 // pred_check_branch
      %23 = sbr.rel (0) target = $region9
    $region8: #{tpu_custom_call.1} parent=1 // pred_region
      _
    $region9: #{tpu_custom_call.1} parent=1 // pred_fallthru
      _
    // Predicated region
    $region10: #{tpu_custom_call.1} parent=1 // pred_check
      _
    $region11: #{tpu_custom_call.1} parent=1 // pred_check_branch
      %25 = sbr.rel (0) target = $region13
    $region12: #{tpu_custom_call.1} parent=1 // pred_region
      _
    $region13: #{tpu_custom_call.1} parent=1 // pred_fallthru
      _
    // Predicated region
    $region14: #{tpu_custom_call.1} parent=1 // pred_check
      _
    $region15: #{tpu_custom_call.1} parent=1 // pred_check_branch
      %27 = sbr.rel (0) target = $region17
    $region16: #{tpu_custom_call.1} parent=1 // pred_region
      _
    $region17: #{tpu_custom_call.1} parent=1 // pred_fallthru
      _
    // Predicated region
    $region18: #{tpu_custom_call.1} parent=1 // pred_check
      _
    $region19: #{tpu_custom_call.1} parent=1 // pred_check_branch
      %29 = sbr.rel (0) target = $region21
    $region20: #{tpu_custom_call.1} parent=1 // pred_region
      _
    $region21: #{tpu_custom_call.1} parent=1 // pred_fallthru
      _
    // Predicated region
    $region22: #{tpu_custom_call.1} parent=1 // pred_check
      _
    $region23: #{tpu_custom_call.1} parent=1 // pred_check_branch
      %31 = sbr.rel (0) target = $region25
    $region24: #{tpu_custom_call.1} parent=1 // pred_region
      _
    $region25: #{tpu_custom_call.1} parent=1 // pred_fallthru
      _
    // Predicated region
    $region26: #{tpu_custom_call.1} parent=1 // pred_check
      _
    $region27: #{tpu_custom_call.1} parent=1 // pred_check_branch
      %33 = sbr.rel (0) target = $region29
    $region28: #{tpu_custom_call.1} parent=1 // pred_region
      _
    $region29: #{tpu_custom_call.1} parent=1 // pred_fallthru
      _
    // Predicated region
    $region30: #{tpu_custom_call.1} parent=1 // pred_check
      _
    $region31: #{tpu_custom_call.1} parent=1 // pred_check_branch
      %35 = sbr.rel (0) target = $region33
    $region32: #{tpu_custom_call.1} parent=1 // pred_region
      _
    $region33: #{tpu_custom_call.1} parent=1 // pred_fallthru
      _
    // Predicated region
    $region34: #{tpu_custom_call.1} parent=1 // pred_check
      _
    $region35: #{tpu_custom_call.1} parent=1 // pred_check_branch
      %37 = sbr.rel (0) target = $region37
    $region36: #{tpu_custom_call.1} parent=1 // pred_region
      _
    $region37: #{tpu_custom_call.1} parent=1 // pred_fallthru
      _
    // Predicated region
    $region38: #{tpu_custom_call.1} parent=1 // pred_check
      _
    $region39: #{tpu_custom_call.1} parent=1 // pred_check_branch
      %39 = sbr.rel (0) target = $region41
    $region40: #{tpu_custom_call.1} parent=1 // pred_region
      _
    $region41: #{tpu_custom_call.1} parent=1 // pred_fallthru
      _
    %v40 = vld [vmem:[%s2] sm:$0xff]
    %v41 = vld [vmem:[%s2 + $0x8] sm:$0xff]
    %v42 = vld [vmem:[%s0] sm:$0xff]
    %v43 = vld [vmem:[%s0 + $0x8] sm:$0xff]
    %v44 = vld [vmem:[%s3] sm:$0xff]
    %v45 = vadd.f32 %v44, 1e-05
    %v46 = vrsqrt.pop %v45
    %48 = vset.pattern.permute.xlu0 2
    %49 = vperm.xlu0 %48, %v44
    %v50 = vpop.permute.xlu0 %49
    %v52 = vsub.f32 %v42, %v50
    %v53 = vsub.f32 %v43, %v50
    %55 = vrot.lane.b32.xlu0 %v46, 125
    %v56 = vpop.permute.xlu0 %55
    %v58 = vmul.f32 %v44, %v56
    %60 = vset.pattern.permute.xlu0 0
    %61 = vperm.xlu0 %60, %v58
    %v62 = vpop.permute.xlu0 %61
    %v64 = vmul.f32 %v52, %v62
    %v65 = vmul.f32 %v53, %v62
    %66 = vset.pattern.permute.xlu0 1
    %67 = vperm.xlu0 %66, %v44
    %v68 = vpop.permute.xlu0 %67
    %v70 = vadd.f32 %v64, %v68
    %v71 = vadd.f32 %v65, %v68
    %73 = vset.pattern.permute.xlu0 0
    %74 = vperm.xlu0 %73, %v40
    %v75 = vpop.permute.xlu0 %74
    %78 = vset.pattern.permute.xlu0 0
    %79 = vperm.xlu0 %78, %v41
    %v80 = vpop.permute.xlu0 %79
    %v82 = vmul.f32 %v70, %v75
    %v83 = vmul.f32 %v71, %v80
    %v84 = vld [vmem:[%s4] sm:$0xff]
    %v85 = vld [vmem:[%s4 + $0x8] sm:$0xff]
    %v86 = vld [vmem:[%s4 + $0x10] sm:$0xff]
    %v87 = vld [vmem:[%s4 + $0x18] sm:$0xff]
    %vm88 = vcmask 261120
    %v90 = vsel %vm88, %v82, 0
    %v93 = vsel %vm88, %v83, 0
    %95 = vmatprep.subr.mxu0 0.0
    %96 = vmatpush1.msra.mxu0 %v84
    %97 = vmatprep.subr.mxu0 0.0
    %98 = vmatpush1.msra.mxu0 %v85
    %99 = vmatprep.subr.mxu0 0.0
    %100 = vmatpush1.msra.mxu0 %v86
    %101 = vmatprep.subr.mxu0 0.0
    %102 = vmatpush1.msra.mxu0 %v87
    %103 = vmatprep.subr.mxu0 0.0
    %104 = vmatpush1.msra.mxu0 0.0
    %105 = vmatprep.subr.mxu0 0.0
    %106 = vmatpush1.msra.mxu0 0.0
    %107 = vmatprep.subr.mxu0 0.0
    %108 = vmatpush1.msra.mxu0 0.0
    %109 = vmatprep.subr.mxu0 0.0
    %110 = vmatpush1.msra.mxu0 0.0
    %111 = vmatprep.subr.mxu0 0.0
    %112 = vmatpush1.msra.mxu0 0.0
    %113 = vmatprep.subr.mxu0 0.0
    %114 = vmatpush1.msra.mxu0 0.0
    %115 = vmatprep.subr.mxu0 0.0
    %116 = vmatpush1.msra.mxu0 0.0
    %117 = vmatprep.subr.mxu0 0.0
    %118 = vmatpush1.msra.mxu0 0.0
    %119 = vmatprep.subr.mxu0 0.0
    %120 = vmatpush1.msra.mxu0 0.0
    %121 = vmatprep.subr.mxu0 0.0
    %122 = vmatpush1.msra.mxu0 0.0
    %123 = vmatprep.subr.mxu0 0.0
    %124 = vmatpush1.msra.mxu0 0.0
    %125 = vmatprep.subr.mxu0 0.0
    %126 = vmatpush1.msra.mxu0 0.0
    %127 = vmatprep.subr.mxu0 0.0
    %128 = vmatpush1.msra.mxu0 0.0
    %129 = vmatprep.subr.mxu0 0.0
    %130 = vmatpush1.msra.mxu0 0.0
    %131 = vmatprep.subr.mxu0 0.0
    %132 = vmatpush1.msra.mxu0 0.0
    %133 = vmatprep.subr.mxu0 0.0
    %134 = vmatpush1.msra.mxu0 0.0
    %135 = vmatprep.subr.mxu0 0.0
    %136 = vmatpush1.msra.mxu0 0.0
    %137 = vmatprep.subr.mxu0 0.0
    %138 = vmatpush1.msra.mxu0 0.0
    %139 = vmatprep.subr.mxu0 0.0
    %140 = vmatpush1.msra.mxu0 0.0
    %141 = vmatprep.subr.mxu0 0.0
    %142 = vmatpush1.msra.mxu0 0.0
    %143 = vmatprep.subr.mxu0 0.0
    %144 = vmatpush1.msra.mxu0 0.0
    %145 = vmatprep.subr.mxu0 0.0
    %146 = vmatpush1.msra.mxu0 0.0
    %147 = vmatprep.subr.mxu0 0.0
    %148 = vmatpush1.msra.mxu0 0.0
    %149 = vmatprep.subr.mxu0 0.0
    %150 = vmatpush1.msra.mxu0 0.0
    %151 = vmatprep.subr.mxu0 0.0
    %152 = vmatpush1.msra.mxu0 0.0
    %153 = vmatprep.subr.mxu0 0.0
    %154 = vmatpush1.msra.mxu0 0.0
    %155 = vmatprep.subr.mxu0 0.0
    %156 = vmatpush1.msra.mxu0 0.0
    %157 = vmatprep.subr.mxu0 0.0
    %158 = vmatpush1.msra.mxu0 0.0
    %159 = vmatprep.mubr.f32.mxu0 0.0
    %160 = vmatmul.mubr.f32.gmra.mrb[0].mxu0 %v90
    %v161 = vpop.f32.mrb[0].mxu0
    %v162 = vadd.f32 0.0, %v161
    %v163 = vpop.f32.mrb[0].mxu0
    %164 = vmatprep.mubr.f32.mxu0 0.0
    %165 = vmatmul.mubr.f32.gmra.mrb[0].mxu0 %v93
    %v166 = vpop.f32.mrb[0].mxu0
    %v167 = vadd.f32 0.0, %v166
    %v168 = vpop.f32.mrb[0].mxu0
    %169 = vdwg.mxu0
    %v170 = vld [vmem:[%s1] sm:$0x1]
    %v171 = vld [vmem:[%s1 + $0x1] sm:$0x1]
    %v172 = vld [vmem:[%s6] sm:$0xff]
    %v173 = vld [vmem:[%s6 + $0x8] sm:$0xff]
    %v174 = vld [vmem:[%s6 + $0x10] sm:$0xff]
    %v175 = vld [vmem:[%s6 + $0x18] sm:$0xff]
    %v176 = vld [vmem:[%s7] sm:$0x1]
    %v178 = vlaneseq
    %v179 = vshrl.u32 %v178, 7
    %v180 = vsub.s32 0, %v179
    %v181 = vrot.slane %v176, %v180
    %v185 = vcombine.low %v170, %v171
    %v187 = vunpack.c.l.s4 1966171168
    %v188 = vunpack.c.0.s8 %v187
    %v189 = vlaneseq
    %v190 = vshrl.u32 %v189, 7
    %v191 = vsub.s32 %v188, %v190
    %v192 = vrot.slane %v185, %v191
    %v194 = vunpack.c.l.s4 1966171168
    %v195 = vunpack.c.0.s8 %v194
    %v196 = vlaneseq
    %v197 = vshrl.u32 %v196, 7
    %v198 = vsub.s32 %v195, %v197
    %v199 = vrot.slane %v192, %v198
    %v200 = vsel %vm88, %v199, 0
    %202 = vmatprep.subr.mxu0 0.0
    %203 = vmatpush1.msra.mxu0 %v172
    %204 = vmatprep.subr.mxu0 0.0
    %205 = vmatpush1.msra.mxu0 %v173
    %206 = vmatprep.subr.mxu0 0.0
    %207 = vmatpush1.msra.mxu0 %v174
    %208 = vmatprep.subr.mxu0 0.0
    %209 = vmatpush1.msra.mxu0 %v175
    %210 = vmatprep.subr.mxu0 0.0
    %211 = vmatpush1.msra.mxu0 0.0
    %212 = vmatprep.subr.mxu0 0.0
    %213 = vmatpush1.msra.mxu0 0.0
    %214 = vmatprep.subr.mxu0 0.0
    %215 = vmatpush1.msra.mxu0 0.0
    %216 = vmatprep.subr.mxu0 0.0
    %217 = vmatpush1.msra.mxu0 0.0
    %218 = vmatprep.subr.mxu0 0.0
    %219 = vmatpush1.msra.mxu0 0.0
    %220 = vmatprep.subr.mxu0 0.0
    %221 = vmatpush1.msra.mxu0 0.0
    %222 = vmatprep.subr.mxu0 0.0
    %223 = vmatpush1.msra.mxu0 0.0
    %224 = vmatprep.subr.mxu0 0.0
    %225 = vmatpush1.msra.mxu0 0.0
    %226 = vmatprep.subr.mxu0 0.0
    %227 = vmatpush1.msra.mxu0 0.0
    %228 = vmatprep.subr.mxu0 0.0
    %229 = vmatpush1.msra.mxu0 0.0
    %230 = vmatprep.subr.mxu0 0.0
    %231 = vmatpush1.msra.mxu0 0.0
    %232 = vmatprep.subr.mxu0 0.0
    %233 = vmatpush1.msra.mxu0 0.0
    %234 = vmatprep.subr.mxu0 0.0
    %235 = vmatpush1.msra.mxu0 0.0
    %236 = vmatprep.subr.mxu0 0.0
    %237 = vmatpush1.msra.mxu0 0.0
    %238 = vmatprep.subr.mxu0 0.0
    %239 = vmatpush1.msra.mxu0 0.0
    %240 = vmatprep.subr.mxu0 0.0
    %241 = vmatpush1.msra.mxu0 0.0
    %242 = vmatprep.subr.mxu0 0.0
    %243 = vmatpush1.msra.mxu0 0.0
    %244 = vmatprep.subr.mxu0 0.0
    %245 = vmatpush1.msra.mxu0 0.0
    %246 = vmatprep.subr.mxu0 0.0
    %247 = vmatpush1.msra.mxu0 0.0
    %248 = vmatprep.subr.mxu0 0.0
    %249 = vmatpush1.msra.mxu0 0.0
    %250 = vmatprep.subr.mxu0 0.0
    %251 = vmatpush1.msra.mxu0 0.0
    %252 = vmatprep.subr.mxu0 0.0
    %253 = vmatpush1.msra.mxu0 0.0
    %254 = vmatprep.subr.mxu0 0.0
    %255 = vmatpush1.msra.mxu0 0.0
    %256 = vmatprep.subr.mxu0 0.0
    %257 = vmatpush1.msra.mxu0 0.0
    %258 = vmatprep.subr.mxu0 0.0
    %259 = vmatpush1.msra.mxu0 0.0
    %260 = vmatprep.subr.mxu0 0.0
    %261 = vmatpush1.msra.mxu0 0.0
    %262 = vmatprep.subr.mxu0 0.0
    %263 = vmatpush1.msra.mxu0 0.0
    %264 = vmatprep.subr.mxu0 0.0
    %265 = vmatpush1.msra.mxu0 0.0
    %266 = vmatprep.mubr.f32.mxu0 0.0
    %267 = vmatmul.mubr.f32.gmra.mrb[0].mxu0 %v200
    %v268 = vpop.f32.mrb[0].mxu0
    %v269 = vadd.f32 %v181, %v268
    %v270 = vpop.f32.mrb[0].mxu0
    %271 = vdwg.mxu0
    %v274 = vunpack.c.l.s4 1966171168
    %v275 = vunpack.c.0.s8 %v274
    %v276 = vlaneseq
    %v277 = vshrl.u32 %v276, 7
    %v278 = vsub.s32 %v275, %v277
    %v279 = vrot.slane %v269, %v278
    %v280 = vcombine.high %v279, %v279
    %v282 = vunpack.c.l.s4 1966171168
    %v283 = vunpack.c.0.s8 %v282
    %v284 = vlaneseq
    %v285 = vshrl.u32 %v284, 7
    %v286 = vsub.s32 %v283, %v285
    %v287 = vrot.slane %v279, %v286
    %v289 = vunpack.c.l.s4 1966171168
    %v290 = vunpack.c.0.s8 %v289
    %v291 = vlaneseq
    %v292 = vshrl.u32 %v291, 7
    %v293 = vsub.s32 %v290, %v292
    %v294 = vrot.slane %v280, %v293
    %v295 = vlaneseq
    %v296 = vshrl.u32 %v295, 7
    %v297 = vsub.s32 0, %v296
    %v298 = vrot.slane %v287, %v297
    %v299 = vlaneseq
    %v300 = vshrl.u32 %v299, 7
    %v301 = vsub.s32 0, %v300
    %v302 = vrot.slane %v294, %v301
    %v305 = vadd.f32 %v162, %v298
    %v306 = vadd.f32 %v167, %v302
    %v307 = vtanh.pop %v305
    %v308 = vtanh.pop %v306
    %v309 = vld [vmem:[%s5] sm:$0xff]
    %v310 = vld [vmem:[%s5 + $0x8] sm:$0xff]
    %vm311 = vcmask 130048
    %v313 = vsel %vm311, %v307, 0
    %v316 = vsel %vm311, %v308, 0
    %318 = vmatprep.subr.mxu0 0.0
    %319 = vmatpush1.msra.mxu0 %v309
    %320 = vmatprep.subr.mxu0 0.0
    %321 = vmatpush1.msra.mxu0 %v310
    %322 = vmatprep.subr.mxu0 0.0
    %323 = vmatpush1.msra.mxu0 0.0
    %324 = vmatprep.subr.mxu0 0.0
    %325 = vmatpush1.msra.mxu0 0.0
    %326 = vmatprep.subr.mxu0 0.0
    %327 = vmatpush1.msra.mxu0 0.0
    %328 = vmatprep.subr.mxu0 0.0
    %329 = vmatpush1.msra.mxu0 0.0
    %330 = vmatprep.subr.mxu0 0.0
    %331 = vmatpush1.msra.mxu0 0.0
    %332 = vmatprep.subr.mxu0 0.0
    %333 = vmatpush1.msra.mxu0 0.0
    %334 = vmatprep.subr.mxu0 0.0
    %335 = vmatpush1.msra.mxu0 0.0
    %336 = vmatprep.subr.mxu0 0.0
    %337 = vmatpush1.msra.mxu0 0.0
    %338 = vmatprep.subr.mxu0 0.0
    %339 = vmatpush1.msra.mxu0 0.0
    %340 = vmatprep.subr.mxu0 0.0
    %341 = vmatpush1.msra.mxu0 0.0
    %342 = vmatprep.subr.mxu0 0.0
    %343 = vmatpush1.msra.mxu0 0.0
    %344 = vmatprep.subr.mxu0 0.0
    %345 = vmatpush1.msra.mxu0 0.0
    %346 = vmatprep.subr.mxu0 0.0
    %347 = vmatpush1.msra.mxu0 0.0
    %348 = vmatprep.subr.mxu0 0.0
    %349 = vmatpush1.msra.mxu0 0.0
    %350 = vmatprep.subr.mxu0 0.0
    %351 = vmatpush1.msra.mxu0 0.0
    %352 = vmatprep.subr.mxu0 0.0
    %353 = vmatpush1.msra.mxu0 0.0
    %354 = vmatprep.subr.mxu0 0.0
    %355 = vmatpush1.msra.mxu0 0.0
    %356 = vmatprep.subr.mxu0 0.0
    %357 = vmatpush1.msra.mxu0 0.0
    %358 = vmatprep.subr.mxu0 0.0
    %359 = vmatpush1.msra.mxu0 0.0
    %360 = vmatprep.subr.mxu0 0.0
    %361 = vmatpush1.msra.mxu0 0.0
    %362 = vmatprep.subr.mxu0 0.0
    %363 = vmatpush1.msra.mxu0 0.0
    %364 = vmatprep.subr.mxu0 0.0
    %365 = vmatpush1.msra.mxu0 0.0
    %366 = vmatprep.subr.mxu0 0.0
    %367 = vmatpush1.msra.mxu0 0.0
    %368 = vmatprep.subr.mxu0 0.0
    %369 = vmatpush1.msra.mxu0 0.0
    %370 = vmatprep.subr.mxu0 0.0
    %371 = vmatpush1.msra.mxu0 0.0
    %372 = vmatprep.subr.mxu0 0.0
    %373 = vmatpush1.msra.mxu0 0.0
    %374 = vmatprep.subr.mxu0 0.0
    %375 = vmatpush1.msra.mxu0 0.0
    %376 = vmatprep.subr.mxu0 0.0
    %377 = vmatpush1.msra.mxu0 0.0
    %378 = vmatprep.subr.mxu0 0.0
    %379 = vmatpush1.msra.mxu0 0.0
    %380 = vmatprep.subr.mxu0 0.0
    %381 = vmatpush1.msra.mxu0 0.0
    %382 = vmatprep.mubr.f32.mxu0 0.0
    %383 = vmatmul.mubr.f32.gmra.mrb[0].mxu0 %v313
    %v384 = vpop.f32.mrb[0].mxu0
    %v385 = vadd.f32 0.0, %v384
    %v386 = vpop.f32.mrb[0].mxu0
    %387 = vmatprep.mubr.f32.mxu0 0.0
    %388 = vmatmul.mubr.f32.gmra.mrb[0].mxu0 %v316
    %v389 = vpop.f32.mrb[0].mxu0
    %v390 = vadd.f32 0.0, %v389
    %v391 = vpop.f32.mrb[0].mxu0
    %392 = vdwg.mxu0
    %v393 = vmul.f32 %v385, %v75
    %v394 = vmul.f32 %v390, %v80
    %v395 = vxor.u32 %v393, 2147483648
    %v396 = vxor.u32 %v394, 2147483648
    %v397 = vmul.f32 %v395, 1.442695
    %v398 = vpow.pop %v397
    %v399 = vmul.f32 %v396, 1.442695
    %v400 = vpow.pop %v399
    %v401 = vadd.f32 %v398, 1.0
    %v402 = vadd.f32 %v400, 1.0
    %v403 = vrcp.pop %v401
    %v404 = vmul.f32 1.0, %v403
    %v405 = vrcp.pop %v402
    %v406 = vmul.f32 1.0, %v405
    %vm407 = vcmp.gt.f32.partialorder %v40, 0.0
    %vm408 = vcmp.gt.f32.partialorder %v41, 0.0
    %411 = vrot.lane.b32.xlu0 %v404, 127
    %v412 = vpop.permute.xlu0 %411
    %413 = vrot.lane.b32.xlu0 %v406, 127
    %v414 = vpop.permute.xlu0 %413
    %v417 = vsel %vm407, %v412, -1e+30
    %v418 = vsel %vm408, %v414, -1e+30
    %vm419 = vcmask 7168
    %v420 = vsel %vm419, %v417, -inf
    %v421 = vrot.slane %v420, 4
    %v422 = vmax.f32 %v420, %v421
    %v423 = vrot.slane %v422, 2
    %v424 = vmax.f32 %v422, %v423
    %v425 = vrot.slane %v424, 1
    %v426 = vmax.f32 %v424, %v425
    %v427 = vsel %vm419, %v418, -inf
    %v428 = vrot.slane %v427, 4
    %v429 = vmax.f32 %v427, %v428
    %v430 = vrot.slane %v429, 2
    %v431 = vmax.f32 %v429, %v430
    %v432 = vrot.slane %v431, 1
    %v433 = vmax.f32 %v431, %v432
    %v434 = vsub.f32 %v417, %v426
    %v435 = vsub.f32 %v418, %v433
    %v436 = vmul.f32 %v434, 1.442695
    %v437 = vpow.pop %v436
    %v438 = vmul.f32 %v435, 1.442695
    %v439 = vpow.pop %v438
    %v440 = vsel %vm419, %v437, 0.0
    %v441 = vrot.slane %v440, 4
    %v442 = vadd.f32 %v440, %v441
    %v443 = vrot.slane %v442, 2
    %v444 = vadd.f32 %v442, %v443
    %v445 = vrot.slane %v444, 1
    %v446 = vadd.f32 %v444, %v445
    %v447 = vsel %vm419, %v439, 0.0
    %v448 = vrot.slane %v447, 4
    %v449 = vadd.f32 %v447, %v448
    %v450 = vrot.slane %v449, 2
    %v451 = vadd.f32 %v449, %v450
    %v452 = vrot.slane %v451, 1
    %v453 = vadd.f32 %v451, %v452
    %v454 = vrcp.pop %v446
    %v455 = vmul.f32 %v437, %v454
    %v456 = vrcp.pop %v453
    %v457 = vmul.f32 %v439, %v456
    %459 = vset.pattern.permute.xlu0 0
    %460 = vperm.xlu0 %459, %v455
    %v461 = vpop.permute.xlu0 %460
    %464 = vset.pattern.permute.xlu0 0
    %465 = vperm.xlu0 %464, %v457
    %v466 = vpop.permute.xlu0 %465
    %v468 = vmul.f32 %v82, %v461
    %v469 = vmul.f32 %v83, %v466
    %v470 = vsel %vm88, %v468, 0.0
    %v471 = vrot.slane %v470, 4
    %v472 = vadd.f32 %v470, %v471
    %v473 = vrot.slane %v472, 2
    %v474 = vadd.f32 %v472, %v473
    %v475 = vrot.slane %v474, 1
    %v476 = vadd.f32 %v474, %v475
    %v477 = vsel %vm88, %v469, 0.0
    %v478 = vrot.slane %v477, 4
    %v479 = vadd.f32 %v477, %v478
    %v480 = vrot.slane %v479, 2
    %v481 = vadd.f32 %v479, %v480
    %v482 = vrot.slane %v481, 1
    %v483 = vadd.f32 %v481, %v482
    %v484 = vld [vmem:[%s8] sm:$0xff]
    %v485 = vld [vmem:[%s8 + $0x8] sm:$0xff]
    %v486 = vld [vmem:[%s8 + $0x10] sm:$0xff]
    %v487 = vld [vmem:[%s8 + $0x18] sm:$0xff]
    %vm490 = vcmask 1041409
    %v491 = vsel %vm490, %v483, %v476
    %v492 = vsel %vm88, %v491, 0
    %494 = vmatprep.subr.mxu0 0.0
    %495 = vmatpush1.msra.mxu0 %v484
    %496 = vmatprep.subr.mxu0 0.0
    %497 = vmatpush1.msra.mxu0 %v485
    %498 = vmatprep.subr.mxu0 0.0
    %499 = vmatpush1.msra.mxu0 %v486
    %500 = vmatprep.subr.mxu0 0.0
    %501 = vmatpush1.msra.mxu0 %v487
    %502 = vmatprep.subr.mxu0 0.0
    %503 = vmatpush1.msra.mxu0 0.0
    %504 = vmatprep.subr.mxu0 0.0
    %505 = vmatpush1.msra.mxu0 0.0
    %506 = vmatprep.subr.mxu0 0.0
    %507 = vmatpush1.msra.mxu0 0.0
    %508 = vmatprep.subr.mxu0 0.0
    %509 = vmatpush1.msra.mxu0 0.0
    %510 = vmatprep.subr.mxu0 0.0
    %511 = vmatpush1.msra.mxu0 0.0
    %512 = vmatprep.subr.mxu0 0.0
    %513 = vmatpush1.msra.mxu0 0.0
    %514 = vmatprep.subr.mxu0 0.0
    %515 = vmatpush1.msra.mxu0 0.0
    %516 = vmatprep.subr.mxu0 0.0
    %517 = vmatpush1.msra.mxu0 0.0
    %518 = vmatprep.subr.mxu0 0.0
    %519 = vmatpush1.msra.mxu0 0.0
    %520 = vmatprep.subr.mxu0 0.0
    %521 = vmatpush1.msra.mxu0 0.0
    %522 = vmatprep.subr.mxu0 0.0
    %523 = vmatpush1.msra.mxu0 0.0
    %524 = vmatprep.subr.mxu0 0.0
    %525 = vmatpush1.msra.mxu0 0.0
    %526 = vmatprep.subr.mxu0 0.0
    %527 = vmatpush1.msra.mxu0 0.0
    %528 = vmatprep.subr.mxu0 0.0
    %529 = vmatpush1.msra.mxu0 0.0
    %530 = vmatprep.subr.mxu0 0.0
    %531 = vmatpush1.msra.mxu0 0.0
    %532 = vmatprep.subr.mxu0 0.0
    %533 = vmatpush1.msra.mxu0 0.0
    %534 = vmatprep.subr.mxu0 0.0
    %535 = vmatpush1.msra.mxu0 0.0
    %536 = vmatprep.subr.mxu0 0.0
    %537 = vmatpush1.msra.mxu0 0.0
    %538 = vmatprep.subr.mxu0 0.0
    %539 = vmatpush1.msra.mxu0 0.0
    %540 = vmatprep.subr.mxu0 0.0
    %541 = vmatpush1.msra.mxu0 0.0
    %542 = vmatprep.subr.mxu0 0.0
    %543 = vmatpush1.msra.mxu0 0.0
    %544 = vmatprep.subr.mxu0 0.0
    %545 = vmatpush1.msra.mxu0 0.0
    %546 = vmatprep.subr.mxu0 0.0
    %547 = vmatpush1.msra.mxu0 0.0
    %548 = vmatprep.subr.mxu0 0.0
    %549 = vmatpush1.msra.mxu0 0.0
    %550 = vmatprep.subr.mxu0 0.0
    %551 = vmatpush1.msra.mxu0 0.0
    %552 = vmatprep.subr.mxu0 0.0
    %553 = vmatpush1.msra.mxu0 0.0
    %554 = vmatprep.subr.mxu0 0.0
    %555 = vmatpush1.msra.mxu0 0.0
    %556 = vmatprep.subr.mxu0 0.0
    %557 = vmatpush1.msra.mxu0 0.0
    %558 = vmatprep.mubr.f32.mxu0 0.0
    %559 = vmatmul.mubr.f32.gmra.mrb[0].mxu0 %v492
    %v560 = vpop.f32.mrb[0].mxu0
    %v561 = vadd.f32 0.0, %v560
    %v562 = vpop.f32.mrb[0].mxu0
    %563 = vdwg.mxu0
    %v564 = vld [vmem:[%s9] sm:$0xff]
    %v565 = vld [vmem:[%s9 + $0x8] sm:$0xff]
    %566 = vrot.lane.b32.xlu0 %v269, 112
    %v567 = vpop.permute.xlu0 %566
    %v570 = vsel %vm311, %v561, 0
    %572 = vmatprep.subr.mxu0 0.0
    %573 = vmatpush1.msra.mxu0 %v564
    %574 = vmatprep.subr.mxu0 0.0
    %575 = vmatpush1.msra.mxu0 %v565
    %576 = vmatprep.subr.mxu0 0.0
    %577 = vmatpush1.msra.mxu0 0.0
    %578 = vmatprep.subr.mxu0 0.0
    %579 = vmatpush1.msra.mxu0 0.0
    %580 = vmatprep.subr.mxu0 0.0
    %581 = vmatpush1.msra.mxu0 0.0
    %582 = vmatprep.subr.mxu0 0.0
    %583 = vmatpush1.msra.mxu0 0.0
    %584 = vmatprep.subr.mxu0 0.0
    %585 = vmatpush1.msra.mxu0 0.0
    %586 = vmatprep.subr.mxu0 0.0
    %587 = vmatpush1.msra.mxu0 0.0
    %588 = vmatprep.subr.mxu0 0.0
    %589 = vmatpush1.msra.mxu0 0.0
    %590 = vmatprep.subr.mxu0 0.0
    %591 = vmatpush1.msra.mxu0 0.0
    %592 = vmatprep.subr.mxu0 0.0
    %593 = vmatpush1.msra.mxu0 0.0
    %594 = vmatprep.subr.mxu0 0.0
    %595 = vmatpush1.msra.mxu0 0.0
    %596 = vmatprep.subr.mxu0 0.0
    %597 = vmatpush1.msra.mxu0 0.0
    %598 = vmatprep.subr.mxu0 0.0
    %599 = vmatpush1.msra.mxu0 0.0
    %600 = vmatprep.subr.mxu0 0.0
    %601 = vmatpush1.msra.mxu0 0.0
    %602 = vmatprep.subr.mxu0 0.0
    %603 = vmatpush1.msra.mxu0 0.0
    %604 = vmatprep.subr.mxu0 0.0
    %605 = vmatpush1.msra.mxu0 0.0
    %606 = vmatprep.subr.mxu0 0.0
    %607 = vmatpush1.msra.mxu0 0.0
    %608 = vmatprep.subr.mxu0 0.0
    %609 = vmatpush1.msra.mxu0 0.0
    %610 = vmatprep.subr.mxu0 0.0
    %611 = vmatpush1.msra.mxu0 0.0
    %612 = vmatprep.subr.mxu0 0.0
    %613 = vmatpush1.msra.mxu0 0.0
    %614 = vmatprep.subr.mxu0 0.0
    %615 = vmatpush1.msra.mxu0 0.0
    %616 = vmatprep.subr.mxu0 0.0
    %617 = vmatpush1.msra.mxu0 0.0
    %618 = vmatprep.subr.mxu0 0.0
    %619 = vmatpush1.msra.mxu0 0.0
    %620 = vmatprep.subr.mxu0 0.0
    %621 = vmatpush1.msra.mxu0 0.0
    %622 = vmatprep.subr.mxu0 0.0
    %623 = vmatpush1.msra.mxu0 0.0
    %624 = vmatprep.subr.mxu0 0.0
    %625 = vmatpush1.msra.mxu0 0.0
    %626 = vmatprep.subr.mxu0 0.0
    %627 = vmatpush1.msra.mxu0 0.0
    %628 = vmatprep.subr.mxu0 0.0
    %629 = vmatpush1.msra.mxu0 0.0
    %630 = vmatprep.subr.mxu0 0.0
    %631 = vmatpush1.msra.mxu0 0.0
    %632 = vmatprep.subr.mxu0 0.0
    %633 = vmatpush1.msra.mxu0 0.0
    %634 = vmatprep.subr.mxu0 0.0
    %635 = vmatpush1.msra.mxu0 0.0
    %636 = vmatprep.mubr.f32.mxu0 0.0
    %637 = vmatmul.mubr.f32.gmra.mrb[0].mxu0 %v570
    %v638 = vpop.f32.mrb[0].mxu0
    %v639 = vadd.f32 %v567, %v638
    %v640 = vpop.f32.mrb[0].mxu0
    %641 = vdwg.mxu0
    %vm642 = vcmask 15360
    %643 = vst.msk [vmem:[%s10] sm:$0xff] %vm642, %v404
    %644 = vst.msk [vmem:[%s10 + $0x8] sm:$0xff] %vm642, %v406
    %vm645 = vcmask 123904
    %646 = vst.msk [vmem:[#allocation2] sm:$0x3] %vm645, %v561
    %647 = vst.msk [vmem:[#allocation4] sm:$0x3] %vm645, %v639
    // Predicated region
    $region42: #{tpu_custom_call.1} parent=1 // pred_check
      _
    $region43: #{tpu_custom_call.1} parent=1 // pred_check_branch
      %649 = sbr.rel (0) target = $region45
    $region44: #{tpu_custom_call.1} parent=1 // pred_region
      _
    $region45: #{tpu_custom_call.1} parent=1 // pred_fallthru
      _
    // Predicated region
    $region46: #{tpu_custom_call.1} parent=1 // pred_check
      _
    $region47: #{tpu_custom_call.1} parent=1 // pred_check_branch
      %651 = sbr.rel (0) target = $region49
    $region48: #{tpu_custom_call.1} parent=1 // pred_region
      %s653 = ssub.s32 32, 32
      %654 = vsyncadd [#allocation3], %s653
      %s656 = sshll.u32 [#allocation2], 4
      %s657 = int_to_ptr.vmem [resolvable:$true] %s656
      %659 = dma.vmem_to_hbm [thread:$0]  %s657, 32, %s11, [#allocation3]
    $region49: #{tpu_custom_call.1} parent=1 // pred_fallthru
      _
    // Predicated region
    $region50: #{tpu_custom_call.1} parent=1 // pred_check
      _
    $region51: #{tpu_custom_call.1} parent=1 // pred_check_branch
      %661 = sbr.rel (0) target = $region53
    $region52: #{tpu_custom_call.1} parent=1 // pred_region
      %s663 = ssub.s32 32, 32
      %664 = vsyncadd [#allocation5], %s663
      %s666 = sshll.u32 [#allocation4], 4
      %s667 = int_to_ptr.vmem [resolvable:$true] %s666
      %669 = dma.vmem_to_hbm [thread:$0]  %s667, 32, %s12, [#allocation5]
    $region53: #{tpu_custom_call.1} parent=1 // pred_fallthru
      _
    // Predicated region
    $region54: #{tpu_custom_call.1} parent=1 // pred_check
      _
    $region55: #{tpu_custom_call.1} parent=1 // pred_check_branch
      %671 = sbr.rel (0) target = $region57
    $region56: #{tpu_custom_call.1} parent=1 // pred_region
      _
    $region57: #{tpu_custom_call.1} parent=1 // pred_fallthru
      _
    // Predicated region
    $region58: #{tpu_custom_call.1} parent=1 // pred_check
      _
    $region59: #{tpu_custom_call.1} parent=1 // pred_check_branch
      %673 = sbr.rel (0) target = $region61
    $region60: #{tpu_custom_call.1} parent=1 // pred_region
      %674 = dma.done [#allocation3], 32
    $region61: #{tpu_custom_call.1} parent=1 // pred_fallthru
      _
    // Predicated region
    $region62: #{tpu_custom_call.1} parent=1 // pred_check
      _
    $region63: #{tpu_custom_call.1} parent=1 // pred_check_branch
      %676 = sbr.rel (0) target = $region65
    $region64: #{tpu_custom_call.1} parent=1 // pred_region
      %677 = dma.done [#allocation5], 32
    $region65: #{tpu_custom_call.1} parent=1 // pred_fallthru
      _
    %678 = vsyncpa [#allocation3], 1
    %679 = vsyncpa [#allocation5], 1

</llo_original>
